<compile_context>
chip_gen: v5e
topology: v5e:2x2
jax: 0.10.0
libtpu: 0.0.40
codegen_flags: <defaults>
</compile_context>

<pallas_src>
import functools

import jax
import jax.numpy as jnp
from jax.experimental import pallas as pl
from jax.experimental.pallas import tpu as pltpu


# ---------------------------------------------------------------------------
# Pallas kernel: fused 3-layer MLP (+ReLU) with a fused [mu | log_var] head.
# All matmuls are bf16 x bf16 -> f32 accumulate on the MXU.
# ---------------------------------------------------------------------------
def _mask_encoder_kernel(x_ref,
                         w1_ref, b1_ref,
                         w2_ref, b2_ref,
                         w3_ref, b3_ref,
                         wh_ref, bh_ref,
                         out_ref):
    h = jnp.dot(x_ref[...], w1_ref[...],
                preferred_element_type=jnp.float32) + b1_ref[...]
    h = jnp.maximum(h, 0.0).astype(jnp.bfloat16)

    h = jnp.dot(h, w2_ref[...],
                preferred_element_type=jnp.float32) + b2_ref[...]
    h = jnp.maximum(h, 0.0).astype(jnp.bfloat16)

    h = jnp.dot(h, w3_ref[...],
                preferred_element_type=jnp.float32) + b3_ref[...]
    h = jnp.maximum(h, 0.0).astype(jnp.bfloat16)

    # Fused [mu | log_var] head -> one lane-dense (TILE_M, 2L) store.
    out_ref[...] = (jnp.dot(h, wh_ref[...],
                            preferred_element_type=jnp.float32) + bh_ref[...])


# ---------------------------------------------------------------------------
# Host-side helpers (param prep, no per-step work).
# ---------------------------------------------------------------------------
def _round_up(x, m):
    return ((x + m - 1) // m) * m


def _nearest_flat_index(size, h_in, w_in):
    """PyTorch F.interpolate(mode='nearest') index map, flattened."""
    h_idx = jnp.clip(jnp.floor(jnp.arange(size) * (h_in / size)).astype(jnp.int32),
                     0, h_in - 1)
    w_idx = jnp.clip(jnp.floor(jnp.arange(size) * (w_in / size)).astype(jnp.int32),
                     0, w_in - 1)
    return (h_idx[:, None] * w_in + w_idx[None, :]).reshape(-1)   # (size*size,)


def init_mask_encoder_params(key, latent_size, size):
    """Deterministic init mimicking nn.Linear default (U(-1/sqrt(fan_in), +)).

    Weights stored as (in, out), biases as (1, out)."""
    dims = [
        (size * size, latent_size * 4),      # encs[0]
        (latent_size * 4, latent_size * 2),  # encs[2]
        (latent_size * 2, latent_size),      # encs[4]
        (latent_size, latent_size),          # mu
        (latent_size, latent_size),          # log_var
    ]
    params = []
    for (fan_in, fan_out) in dims:
        key, kw, kb = jax.random.split(key, 3)
        bound = 1.0 / (fan_in ** 0.5)
        w = jax.random.uniform(kw, (fan_in, fan_out), jnp.float32, -bound, bound)
        b = jax.random.uniform(kb, (1, fan_out), jnp.float32, -bound, bound)
        params.append((w, b))
    return params


def prepare_mask_encoder_params(params, *, size, h_in, w_in):
    """Fold nearest-resize into w1, fuse mu/log_var heads, cast weights to bf16.

    The nearest resize is x_res[p] = x[flat[p]], so
        x_res @ W1 == x @ W1_folded,  W1_folded[q] = sum_{p: flat[p]==q} W1[p].
    """
    (w1, b1), (w2, b2), (w3, b3), (wmu, bmu), (wlv, blv) = params

    flat = _nearest_flat_index(size, h_in, w_in)
    w1_folded = jnp.zeros((h_in * w_in, w1.shape[1]), jnp.float32).at[flat].add(w1)

    wh = jnp.concatenate([wmu, wlv], axis=1)   # (L, 2L)
    bh = jnp.concatenate([bmu, blv], axis=1)   # (1, 2L)

    bf = jnp.bfloat16
    return (w1_folded.astype(bf), b1,
            w2.astype(bf), b2,
            w3.astype(bf), b3,
            wh.astype(bf), bh)


# ---------------------------------------------------------------------------
# Forward wrapper.
# ---------------------------------------------------------------------------
@functools.partial(jax.jit, static_argnames=("latent_size",))
def mask_encoder_forward(x, prepared_params, *, latent_size):
    """x: (B, C, H, W) float32. Returns (mu, log_var), each (B, C, latent)."""
    B, C, H, W = x.shape
    M, K = B * C, H * W
    L = latent_size
    H1, H2, OUT = 4 * L, 2 * L, 2 * L

    w1, b1, w2, b2, w3, b3, wh, bh = prepared_params

    # Row tiling: keep stores unmasked (pad M), bound VMEM, and give the
    # pipeline a "parallel" row axis for v7x megacore sharding.
    TILE_M = min(256, _round_up(M, 16))
    M_pad = _round_up(M, TILE_M)
    x2d = x.reshape(M, K)
    if M_pad != M:
        x2d = jnp.pad(x2d, ((0, M_pad - M), (0, 0)))
    x2d = x2d.astype(jnp.bfloat16)

    grid = (M_pad // TILE_M,)
    row_tile = lambda i: (i, 0)
    resident = lambda i: (0, 0)

    flops = 2 * M_pad * (K * H1 + H1 * H2 + H2 * L + L * OUT)
    bytes_accessed = (M_pad * K * 2                                   # x (bf16)
                      + (K * H1 + H1 * H2 + H2 * L + L * OUT) * 2     # weights
                      + (H1 + H2 + L + OUT) * 4                       # biases
                      + M_pad * OUT * 4)                              # output

    out2d = pl.pallas_call(
        _mask_encoder_kernel,
        out_shape=jax.ShapeDtypeStruct((M_pad, OUT), jnp.float32),
        grid=grid,
        in_specs=[
            pl.BlockSpec((TILE_M, K), row_tile),   # x tile
            pl.BlockSpec((K, H1), resident),       # w1 (resize folded in)
            pl.BlockSpec((1, H1), resident),       # b1
            pl.BlockSpec((H1, H2), resident),      # w2
            pl.BlockSpec((1, H2), resident),       # b2
            pl.BlockSpec((H2, L), resident),       # w3
            pl.BlockSpec((1, L), resident),        # b3
            pl.BlockSpec((L, OUT), resident),      # fused [wmu | wlv]
            pl.BlockSpec((1, OUT), resident),      # fused [bmu | blv]
        ],
        out_specs=pl.BlockSpec((TILE_M, OUT), row_tile),
        compiler_params=pltpu.CompilerParams(
            dimension_semantics=("parallel",),
            vmem_limit_bytes=32 * 1024 * 1024,
        ),
        cost_estimate=pl.CostEstimate(
            flops=flops, transcendentals=0, bytes_accessed=bytes_accessed),
    )(x2d, w1, b1, w2, b2, w3, b3, wh, bh)

    out2d = out2d[:M]
    mu = out2d[:, :L].reshape(B, C, L)
    log_var = out2d[:, L:].reshape(B, C, L)
    return mu, log_var


# ---------------------------------------------------------------------------
# Plain-JAX references for correctness checks.
# ---------------------------------------------------------------------------
def _nearest_resize_nchw(x, size):
    _, _, h_in, w_in = x.shape
    h_idx = jnp.clip(jnp.floor(jnp.arange(size) * (h_in / size)).astype(jnp.int32),
                     0, h_in - 1)
    w_idx = jnp.clip(jnp.floor(jnp.arange(size) * (w_in / size)).astype(jnp.int32),
                     0, w_in - 1)
    return jnp.take(jnp.take(x, h_idx, axis=2), w_idx, axis=3)


def _reference_forward_f32(x, params, latent_size, size):
    """Original module semantics: f32, explicit resize, separate heads."""
    B, C, _, _ = x.shape
    hi = jax.lax.Precision.HIGHEST
    xr = _nearest_resize_nchw(x, size).reshape(B * C, size * size)
    (w1, b1), (w2, b2), (w3, b3), (wmu, bmu), (wlv, blv) = params
    h = jnp.maximum(jnp.dot(xr, w1, precision=hi) + b1, 0.0)
    h = jnp.maximum(jnp.dot(h, w2, precision=hi) + b2, 0.0)
    h = jnp.maximum(jnp.dot(h, w3, precision=hi) + b3, 0.0)
    mu = jnp.dot(h, wmu, precision=hi) + bmu
    lv = jnp.dot(h, wlv, precision=hi) + blv
    return mu.reshape(B, C, latent_size), lv.reshape(B, C, latent_size)


def _reference_forward_prepared(x, prepared, latent_size):
    """Numerics-matched reference: folded bf16 weights, bf16 activations,
    f32 accumulation — mirrors exactly what the kernel computes."""
    B, C, H, W = x.shape
    x2d = x.reshape(B * C, H * W).astype(jnp.bfloat16)
    w1, b1, w2, b2, w3, b3, wh, bh = prepared
    hi = jax.lax.Precision.HIGHEST

    def dot(a, b):
        return jnp.dot(a.astype(jnp.float32), b.astype(jnp.float32), precision=hi)

    h = jnp.maximum(dot(x2d, w1) + b1, 0.0).astype(jnp.bfloat16)
    h = jnp.maximum(dot(h, w2) + b2, 0.0).astype(jnp.bfloat16)
    h = jnp.maximum(dot(h, w3) + b3, 0.0).astype(jnp.bfloat16)
    out = dot(h, wh) + bh
    mu = out[:, :latent_size].reshape(B, C, latent_size)
    lv = out[:, latent_size:].reshape(B, C, latent_size)
    return mu, lv


if __name__ == "__main__":
    # Small, module-consistent shapes: batch=2, channels=4, 16x16 input mask,
    # internal resize size=32 (first Linear sees 32^2=1024 features, folded to
    # 16*16=256), latent=32.
    LATENT = 32
    SIZE = 32
    B, C, H, W = 2, 4, 16, 16

    key = jax.random.PRNGKey(0)
    key, kx = jax.random.split(key)
    x = jax.random.uniform(kx, (B, C, H, W), jnp.float32)

    raw_params = init_mask_encoder_params(key, LATENT, SIZE)
    prepared = prepare_mask_encoder_params(raw_params, size=SIZE, h_in=H, w_in=W)

    mu, log_var = mask_encoder_forward(x, prepared, latent_size=LATENT)
    jax.block_until_ready((mu, log_var))

    assert mu.shape == (B, C, LATENT) and log_var.shape == (B, C, LATENT)

    # Exact-ish check against the numerics-matched reference (same bf16 params).
    mu_k, lv_k = _reference_forward_prepared(x, prepared, LATENT)
    assert jnp.allclose(mu, mu_k, atol=1e-3, rtol=1e-3)
    assert jnp.allclose(log_var, lv_k, atol=1e-3, rtol=1e-3)

    # Semantic check against the original f32 module (bf16 quantization slack).
    mu_f, lv_f = _reference_forward_f32(x, raw_params, LATENT, SIZE)
    assert jnp.allclose(mu, mu_f, atol=5e-2, rtol=5e-2)
    assert jnp.allclose(log_var, lv_f, atol=5e-2, rtol=5e-2)

    print("KERNEL_OK")
</pallas_src>

<mosaic_0001>
module attributes {stable_mosaic.version = 11 : i64} {
  func.func @_mask_encoder_kernel(%arg0: i32, %arg1: memref<16x256xbf16, #tpu.memory_space<vmem>>, %arg2: memref<256x128xbf16, #tpu.memory_space<vmem>>, %arg3: memref<1x128xf32, #tpu.memory_space<vmem>>, %arg4: memref<128x64xbf16, #tpu.memory_space<vmem>>, %arg5: memref<1x64xf32, #tpu.memory_space<vmem>>, %arg6: memref<64x32xbf16, #tpu.memory_space<vmem>>, %arg7: memref<1x32xf32, #tpu.memory_space<vmem>>, %arg8: memref<32x64xbf16, #tpu.memory_space<vmem>>, %arg9: memref<1x64xf32, #tpu.memory_space<vmem>>, %arg10: memref<16x64xf32, #tpu.memory_space<vmem>>) attributes {dimension_semantics = [#tpu.dimension_semantics<parallel>], iteration_bounds = array<i64: 1>, scalar_prefetch = 0 : i64, scratch_operands = 0 : i64, tpu.core_type = #tpu.core_type<tc>, window_params = [{transform_indices = @transform_0, window_bounds = array<i64: 16, 256>}, {pipeline_mode = #tpu.pipeline_mode<synchronous>, transform_indices = @transform_1, window_bounds = array<i64: 256, 128>}, {pipeline_mode = #tpu.pipeline_mode<synchronous>, transform_indices = @transform_2, window_bounds = array<i64: 1, 128>}, {pipeline_mode = #tpu.pipeline_mode<synchronous>, transform_indices = @transform_3, window_bounds = array<i64: 128, 64>}, {pipeline_mode = #tpu.pipeline_mode<synchronous>, transform_indices = @transform_4, window_bounds = array<i64: 1, 64>}, {pipeline_mode = #tpu.pipeline_mode<synchronous>, transform_indices = @transform_5, window_bounds = array<i64: 64, 32>}, {pipeline_mode = #tpu.pipeline_mode<synchronous>, transform_indices = @transform_6, window_bounds = array<i64: 1, 32>}, {pipeline_mode = #tpu.pipeline_mode<synchronous>, transform_indices = @transform_7, window_bounds = array<i64: 32, 64>}, {pipeline_mode = #tpu.pipeline_mode<synchronous>, transform_indices = @transform_8, window_bounds = array<i64: 1, 64>}, {transform_indices = @transform_9, window_bounds = array<i64: 16, 64>}]} {
    %c0 = arith.constant 0 : index
    %c0_0 = arith.constant 0 : index
    %0 = vector.load %arg1[%c0, %c0_0] : memref<16x256xbf16, #tpu.memory_space<vmem>>, vector<16x256xbf16>
    %c0_1 = arith.constant 0 : index
    %c0_2 = arith.constant 0 : index
    %1 = vector.load %arg2[%c0_1, %c0_2] : memref<256x128xbf16, #tpu.memory_space<vmem>>, vector<256x128xbf16>
    %cst = arith.constant dense<0.000000e+00> : vector<16x128xf32>
    %2 = tpu.matmul %0, %1, %cst {dimension_numbers = #tpu.dot_dimension_numbers<[1], [0], [0], [1], [0, 0, 1, 1], [], []>} : vector<16x256xbf16>, vector<256x128xbf16>, vector<16x128xf32> -> vector<16x128xf32>
    %c0_3 = arith.constant 0 : index
    %c0_4 = arith.constant 0 : index
    %3 = vector.load %arg3[%c0_3, %c0_4] : memref<1x128xf32, #tpu.memory_space<vmem>>, vector<1x128xf32>
    %4 = vector.broadcast %3 : vector<1x128xf32> to vector<16x128xf32>
    %5 = arith.addf %2, %4 : vector<16x128xf32>
    %cst_5 = arith.constant 0.000000e+00 : f32
    %6 = vector.broadcast %cst_5 : f32 to vector<16x128xf32>
    %7 = arith.maximumf %5, %6 : vector<16x128xf32>
    %8 = arith.truncf %7 : vector<16x128xf32> to vector<16x128xbf16>
    %c0_6 = arith.constant 0 : index
    %c0_7 = arith.constant 0 : index
    %9 = vector.load %arg4[%c0_6, %c0_7] : memref<128x64xbf16, #tpu.memory_space<vmem>>, vector<128x64xbf16>
    %cst_8 = arith.constant dense<0.000000e+00> : vector<16x64xf32>
    %10 = tpu.matmul %8, %9, %cst_8 {dimension_numbers = #tpu.dot_dimension_numbers<[1], [0], [0], [1], [0, 0, 1, 1], [], []>} : vector<16x128xbf16>, vector<128x64xbf16>, vector<16x64xf32> -> vector<16x64xf32>
    %c0_9 = arith.constant 0 : index
    %c0_10 = arith.constant 0 : index
    %11 = vector.load %arg5[%c0_9, %c0_10] : memref<1x64xf32, #tpu.memory_space<vmem>>, vector<1x64xf32>
    %12 = vector.broadcast %11 : vector<1x64xf32> to vector<16x64xf32>
    %13 = arith.addf %10, %12 : vector<16x64xf32>
    %cst_11 = arith.constant 0.000000e+00 : f32
    %14 = vector.broadcast %cst_11 : f32 to vector<16x64xf32>
    %15 = arith.maximumf %13, %14 : vector<16x64xf32>
    %16 = arith.truncf %15 : vector<16x64xf32> to vector<16x64xbf16>
    %c0_12 = arith.constant 0 : index
    %c0_13 = arith.constant 0 : index
    %17 = vector.load %arg6[%c0_12, %c0_13] : memref<64x32xbf16, #tpu.memory_space<vmem>>, vector<64x32xbf16>
    %cst_14 = arith.constant dense<0.000000e+00> : vector<16x32xf32>
    %18 = tpu.matmul %16, %17, %cst_14 {dimension_numbers = #tpu.dot_dimension_numbers<[1], [0], [0], [1], [0, 0, 1, 1], [], []>} : vector<16x64xbf16>, vector<64x32xbf16>, vector<16x32xf32> -> vector<16x32xf32>
    %c0_15 = arith.constant 0 : index
    %c0_16 = arith.constant 0 : index
    %19 = vector.load %arg7[%c0_15, %c0_16] : memref<1x32xf32, #tpu.memory_space<vmem>>, vector<1x32xf32>
    %20 = vector.broadcast %19 : vector<1x32xf32> to vector<16x32xf32>
    %21 = arith.addf %18, %20 : vector<16x32xf32>
    %cst_17 = arith.constant 0.000000e+00 : f32
    %22 = vector.broadcast %cst_17 : f32 to vector<16x32xf32>
    %23 = arith.maximumf %21, %22 : vector<16x32xf32>
    %24 = arith.truncf %23 : vector<16x32xf32> to vector<16x32xbf16>
    %c0_18 = arith.constant 0 : index
    %c0_19 = arith.constant 0 : index
    %25 = vector.load %arg8[%c0_18, %c0_19] : memref<32x64xbf16, #tpu.memory_space<vmem>>, vector<32x64xbf16>
    %cst_20 = arith.constant dense<0.000000e+00> : vector<16x64xf32>
    %26 = tpu.matmul %24, %25, %cst_20 {dimension_numbers = #tpu.dot_dimension_numbers<[1], [0], [0], [1], [0, 0, 1, 1], [], []>} : vector<16x32xbf16>, vector<32x64xbf16>, vector<16x64xf32> -> vector<16x64xf32>
    %c0_21 = arith.constant 0 : index
    %c0_22 = arith.constant 0 : index
    %27 = vector.load %arg9[%c0_21, %c0_22] : memref<1x64xf32, #tpu.memory_space<vmem>>, vector<1x64xf32>
    %28 = vector.broadcast %27 : vector<1x64xf32> to vector<16x64xf32>
    %29 = arith.addf %26, %28 : vector<16x64xf32>
    %c0_23 = arith.constant 0 : index
    %c0_24 = arith.constant 0 : index
    %30 = vector.load %arg10[%c0_23, %c0_24] : memref<16x64xf32, #tpu.memory_space<vmem>>, vector<16x64xf32>
    tpu.vector_store %arg10[%c0_23, %c0_24], %29 {strides = array<i32>} : memref<16x64xf32, #tpu.memory_space<vmem>>, vector<16x64xf32>,
    return
  }
  func.func @transform_0(%arg0: i32) -> (i32, i32) {
    %c0_i32 = arith.constant 0 : i32
    %c0_i32_0 = arith.constant 0 : i32
    return %arg0, %c0_i32 : i32, i32
  }
  func.func @transform_1(%arg0: i32) -> (i32, i32) {
    %c0_i32 = arith.constant 0 : i32
    %c0_i32_0 = arith.constant 0 : i32
    %c0_i32_1 = arith.constant 0 : i32
    return %c0_i32, %c0_i32_0 : i32, i32
  }
  func.func @transform_2(%arg0: i32) -> (i32, i32) {
    %c0_i32 = arith.constant 0 : i32
    %c0_i32_0 = arith.constant 0 : i32
    %c0_i32_1 = arith.constant 0 : i32
    return %c0_i32, %c0_i32_0 : i32, i32
  }
  func.func @transform_3(%arg0: i32) -> (i32, i32) {
    %c0_i32 = arith.constant 0 : i32
    %c0_i32_0 = arith.constant 0 : i32
    %c0_i32_1 = arith.constant 0 : i32
    return %c0_i32, %c0_i32_0 : i32, i32
  }
  func.func @transform_4(%arg0: i32) -> (i32, i32) {
    %c0_i32 = arith.constant 0 : i32
    %c0_i32_0 = arith.constant 0 : i32
    %c0_i32_1 = arith.constant 0 : i32
    return %c0_i32, %c0_i32_0 : i32, i32
  }
  func.func @transform_5(%arg0: i32) -> (i32, i32) {
    %c0_i32 = arith.constant 0 : i32
    %c0_i32_0 = arith.constant 0 : i32
    %c0_i32_1 = arith.constant 0 : i32
    return %c0_i32, %c0_i32_0 : i32, i32
  }
  func.func @transform_6(%arg0: i32) -> (i32, i32) {
    %c0_i32 = arith.constant 0 : i32
    %c0_i32_0 = arith.constant 0 : i32
    %c0_i32_1 = arith.constant 0 : i32
    return %c0_i32, %c0_i32_0 : i32, i32
  }
  func.func @transform_7(%arg0: i32) -> (i32, i32) {
    %c0_i32 = arith.constant 0 : i32
    %c0_i32_0 = arith.constant 0 : i32
    %c0_i32_1 = arith.constant 0 : i32
    return %c0_i32, %c0_i32_0 : i32, i32
  }
  func.func @transform_8(%arg0: i32) -> (i32, i32) {
    %c0_i32 = arith.constant 0 : i32
    %c0_i32_0 = arith.constant 0 : i32
    %c0_i32_1 = arith.constant 0 : i32
    return %c0_i32, %c0_i32_0 : i32, i32
  }
  func.func @transform_9(%arg0: i32) -> (i32, i32) {
    %c0_i32 = arith.constant 0 : i32
    %c0_i32_0 = arith.constant 0 : i32
    return %arg0, %c0_i32 : i32, i32
  }
}

</mosaic_0001>

<llo_original>
// kernel: mask_encoder_forward.1
$region0: #{mask_encoder_forward.1}
  #allocation0 [shape = 'u32[]', space=smem, size = 0x4, offset = 0x4, fixed_abs, tag = 'smem constant byte address 0x4 - core index']
  #allocation1 [shape = 'u32[72,128]{1,0:T(1,128)}', space=vmem, size = 0x9000, scoped, tag = 'internal scratch']
  %s0 = inlined_call_operand.vmem [shape: bf16[16,256], index: 0, kind: input, shape index: {}]
  %s1 = inlined_call_operand.vmem [shape: bf16[256,128], index: 1, kind: input, shape index: {}]
  %s2 = inlined_call_operand.vmem [shape: f32[1,128], index: 2, kind: input, shape index: {}]
  %s3 = inlined_call_operand.vmem [shape: bf16[128,64], index: 3, kind: input, shape index: {}]
  %s4 = inlined_call_operand.vmem [shape: f32[1,64], index: 4, kind: input, shape index: {}]
  %s5 = inlined_call_operand.vmem [shape: bf16[64,32], index: 5, kind: input, shape index: {}]
  %s6 = inlined_call_operand.vmem [shape: f32[1,32], index: 6, kind: input, shape index: {}]
  %s7 = inlined_call_operand.vmem [shape: bf16[32,64], index: 7, kind: input, shape index: {}]
  %s8 = inlined_call_operand.vmem [shape: f32[1,64], index: 8, kind: input, shape index: {}]
  %s9 = inlined_call_operand.vmem [shape: f32[16,64], index: 9, kind: output, shape index: {}]
  %s10 = sld [smem:[#allocation0]]
  $region46: #{mask_encoder_forward.1} parent=0
    _
  %s12 = ssub.s32 1, %s10
  %s13 = scalar_select 0, %s12, %s10
  // Predicated region
  $region2: #{mask_encoder_forward.1} parent=0 // pred_check
    _
  $region3: #{mask_encoder_forward.1} parent=0 // pred_check_branch
    %15 = sbr.rel (0) target = $region5
  $region4: #{mask_encoder_forward.1} parent=0 // pred_region
    _
  $region5: #{mask_encoder_forward.1} parent=0 // pred_fallthru
    _
  // Predicated region
  $region6: #{mask_encoder_forward.1} parent=0 // pred_check
    _
  $region7: #{mask_encoder_forward.1} parent=0 // pred_check_branch
    %17 = sbr.rel (0) target = $region9
  $region8: #{mask_encoder_forward.1} parent=0 // pred_region
    _
  $region9: #{mask_encoder_forward.1} parent=0 // pred_fallthru
    _
  // Predicated region
  $region10: #{mask_encoder_forward.1} parent=0 // pred_check
    _
  $region11: #{mask_encoder_forward.1} parent=0 // pred_check_branch
    %19 = sbr.rel (0) target = $region13
  $region12: #{mask_encoder_forward.1} parent=0 // pred_region
    _
  $region13: #{mask_encoder_forward.1} parent=0 // pred_fallthru
    _
  // Predicated region
  $region14: #{mask_encoder_forward.1} parent=0 // pred_check
    _
  $region15: #{mask_encoder_forward.1} parent=0 // pred_check_branch
    %21 = sbr.rel (0) target = $region17
  $region16: #{mask_encoder_forward.1} parent=0 // pred_region
    _
  $region17: #{mask_encoder_forward.1} parent=0 // pred_fallthru
    _
  // Predicated region
  $region18: #{mask_encoder_forward.1} parent=0 // pred_check
    _
  $region19: #{mask_encoder_forward.1} parent=0 // pred_check_branch
    %23 = sbr.rel (0) target = $region21
  $region20: #{mask_encoder_forward.1} parent=0 // pred_region
    _
  $region21: #{mask_encoder_forward.1} parent=0 // pred_fallthru
    _
  // Predicated region
  $region22: #{mask_encoder_forward.1} parent=0 // pred_check
    _
  $region23: #{mask_encoder_forward.1} parent=0 // pred_check_branch
    %25 = sbr.rel (0) target = $region25
  $region24: #{mask_encoder_forward.1} parent=0 // pred_region
    _
  $region25: #{mask_encoder_forward.1} parent=0 // pred_fallthru
    _
  // Predicated region
  $region26: #{mask_encoder_forward.1} parent=0 // pred_check
    _
  $region27: #{mask_encoder_forward.1} parent=0 // pred_check_branch
    %27 = sbr.rel (0) target = $region29
  $region28: #{mask_encoder_forward.1} parent=0 // pred_region
    _
  $region29: #{mask_encoder_forward.1} parent=0 // pred_fallthru
    _
  // Predicated region
  $region30: #{mask_encoder_forward.1} parent=0 // pred_check
    _
  $region31: #{mask_encoder_forward.1} parent=0 // pred_check_branch
    %29 = sbr.rel (0) target = $region33
  $region32: #{mask_encoder_forward.1} parent=0 // pred_region
    _
  $region33: #{mask_encoder_forward.1} parent=0 // pred_fallthru
    _
  // Predicated region
  $region34: #{mask_encoder_forward.1} parent=0 // pred_check
    _
  $region35: #{mask_encoder_forward.1} parent=0 // pred_check_branch
    %31 = sbr.rel (0) target = $region37
  $region36: #{mask_encoder_forward.1} parent=0 // pred_region
    _
  $region37: #{mask_encoder_forward.1} parent=0 // pred_fallthru
    _
  %v33 = vld [vmem:[%s0] sm:$0xff]
  %v34 = vld [vmem:[%s0 + $0x8] sm:$0xff]
  %v35 = vld [vmem:[%s1] sm:$0xf]
  %v36 = vld [vmem:[%s1 + $0x4] sm:$0xf]
  %v37 = vld [vmem:[%s1 + $0x8] sm:$0xf]
  %v38 = vld [vmem:[%s1 + $0xc] sm:$0xf]
  %v39 = vld [vmem:[%s1 + $0x10] sm:$0xf]
  %v40 = vld [vmem:[%s1 + $0x14] sm:$0xf]
  %v41 = vld [vmem:[%s1 + $0x18] sm:$0xf]
  %v42 = vld [vmem:[%s1 + $0x1c] sm:$0xf]
  %v43 = vld [vmem:[%s1 + $0x20] sm:$0xf]
  %v44 = vld [vmem:[%s1 + $0x24] sm:$0xf]
  %v45 = vld [vmem:[%s1 + $0x28] sm:$0xf]
  %v46 = vld [vmem:[%s1 + $0x2c] sm:$0xf]
  %v47 = vld [vmem:[%s1 + $0x30] sm:$0xf]
  %v48 = vld [vmem:[%s1 + $0x34] sm:$0xf]
  %v49 = vld [vmem:[%s1 + $0x38] sm:$0xf]
  %v50 = vld [vmem:[%s1 + $0x3c] sm:$0xf]
  %v51 = vld [vmem:[%s1 + $0x40] sm:$0xf]
  %v52 = vld [vmem:[%s1 + $0x44] sm:$0xf]
  %v53 = vld [vmem:[%s1 + $0x48] sm:$0xf]
  %v54 = vld [vmem:[%s1 + $0x4c] sm:$0xf]
  %v55 = vld [vmem:[%s1 + $0x50] sm:$0xf]
  %v56 = vld [vmem:[%s1 + $0x54] sm:$0xf]
  %v57 = vld [vmem:[%s1 + $0x58] sm:$0xf]
  %v58 = vld [vmem:[%s1 + $0x5c] sm:$0xf]
  %v59 = vld [vmem:[%s1 + $0x60] sm:$0xf]
  %v60 = vld [vmem:[%s1 + $0x64] sm:$0xf]
  %v61 = vld [vmem:[%s1 + $0x68] sm:$0xf]
  %v62 = vld [vmem:[%s1 + $0x6c] sm:$0xf]
  %v63 = vld [vmem:[%s1 + $0x70] sm:$0xf]
  %v64 = vld [vmem:[%s1 + $0x74] sm:$0xf]
  %v65 = vld [vmem:[%s1 + $0x78] sm:$0xf]
  %v66 = vld [vmem:[%s1 + $0x7c] sm:$0xf]
  %v67 = vld [vmem:[%s2] sm:$0x1]
  %v69 = vperm.slane %v67, 0
  %v73 = vunpack.c.l.b16 %v33
  %v74 = vunpack.c.h.b16 %v33
  %v75 = vunpack.c.l.b16 %v34
  %v76 = vunpack.c.h.b16 %v34
  %v77 = vpack.c.b16 %v75, %v73
  %v78 = vpack.c.b16 %v76, %v74
  %v113 = vunpack.c.l.b16 %v35
  %v114 = vunpack.c.l.b16 %v36
  %v115 = vunpack.c.l.b16 %v37
  %v116 = vunpack.c.l.b16 %v38
  %v117 = vunpack.c.l.b16 %v39
  %v118 = vunpack.c.l.b16 %v40
  %v119 = vunpack.c.l.b16 %v41
  %v120 = vunpack.c.l.b16 %v42
  %v121 = vunpack.c.l.b16 %v43
  %v122 = vunpack.c.l.b16 %v44
  %v123 = vunpack.c.l.b16 %v45
  %v124 = vunpack.c.l.b16 %v46
  %v125 = vunpack.c.l.b16 %v47
  %v126 = vunpack.c.l.b16 %v48
  %v127 = vunpack.c.l.b16 %v49
  %v128 = vunpack.c.l.b16 %v50
  %v129 = vunpack.c.l.b16 %v51
  %v130 = vunpack.c.l.b16 %v52
  %v131 = vunpack.c.l.b16 %v53
  %v132 = vunpack.c.l.b16 %v54
  %v133 = vunpack.c.l.b16 %v55
  %v134 = vunpack.c.l.b16 %v56
  %v135 = vunpack.c.l.b16 %v57
  %v136 = vunpack.c.l.b16 %v58
  %v137 = vunpack.c.l.b16 %v59
  %v138 = vunpack.c.l.b16 %v60
  %v139 = vunpack.c.l.b16 %v61
  %v140 = vunpack.c.l.b16 %v62
  %v141 = vunpack.c.l.b16 %v63
  %v142 = vunpack.c.l.b16 %v64
  %v143 = vunpack.c.l.b16 %v65
  %v144 = vunpack.c.l.b16 %v66
  %v145 = vpack.c.b16 %v114, %v113
  %v146 = vpack.c.b16 %v116, %v115
  %v147 = vpack.c.b16 %v118, %v117
  %v148 = vpack.c.b16 %v120, %v119
  %v149 = vpack.c.b16 %v122, %v121
  %v150 = vpack.c.b16 %v124, %v123
  %v151 = vpack.c.b16 %v126, %v125
  %v152 = vpack.c.b16 %v128, %v127
  %v153 = vpack.c.b16 %v130, %v129
  %v154 = vpack.c.b16 %v132, %v131
  %v155 = vpack.c.b16 %v134, %v133
  %v156 = vpack.c.b16 %v136, %v135
  %v157 = vpack.c.b16 %v138, %v137
  %v158 = vpack.c.b16 %v140, %v139
  %v159 = vpack.c.b16 %v142, %v141
  %v160 = vpack.c.b16 %v144, %v143
  %177 = vmatpush.bf16.msra.mxu0 %v152
  %178 = vmatpush.bf16.msra.mxu0 %v151
  %179 = vmatpush.bf16.msra.mxu0 %v150
  %180 = vmatpush.bf16.msra.mxu0 %v149
  %181 = vmatpush.bf16.msra.mxu0 %v148
  %182 = vmatpush.bf16.msra.mxu0 %v147
  %183 = vmatpush.bf16.msra.mxu0 %v146
  %184 = vmatpush.bf16.msra.mxu0 %v145
  %185 = vmatmul.bf16.gmra.mxu0 %v77
  %v186 = vpop.f32.mrf.mxu0
  %v187 = vadd.f32 %v69, %v186
  %v188 = vpop.f32.mrf.mxu0
  %v189 = vadd.f32 %v69, %v188
  %190 = vdwg.mxu0
  %191 = vmatpush.bf16.msra.mxu0 %v160
  %192 = vmatpush.bf16.msra.mxu0 %v159
  %193 = vmatpush.bf16.msra.mxu0 %v158
  %194 = vmatpush.bf16.msra.mxu0 %v157
  %195 = vmatpush.bf16.msra.mxu0 %v156
  %196 = vmatpush.bf16.msra.mxu0 %v155
  %197 = vmatpush.bf16.msra.mxu0 %v154
  %198 = vmatpush.bf16.msra.mxu0 %v153
  %199 = vmatmul.bf16.gmra.mxu0 %v78
  %v200 = vpop.f32.mrf.mxu0
  %v201 = vadd.f32 %v187, %v200
  %v202 = vpop.f32.mrf.mxu0
  %v203 = vadd.f32 %v189, %v202
  %204 = vdwg.mxu0
  %v205 = vmax.f32 %v201, 0.0
  %v206 = vmax.f32 %v203, 0.0
  %v207 = vpack.c.bf16 %v206, %v205
  %v208 = vld [vmem:[%s3] sm:$0xf]
  %v209 = vld [vmem:[%s3 + $0x4] sm:$0xf]
  %v210 = vld [vmem:[%s3 + $0x8] sm:$0xf]
  %v211 = vld [vmem:[%s3 + $0xc] sm:$0xf]
  %v212 = vld [vmem:[%s3 + $0x10] sm:$0xf]
  %v213 = vld [vmem:[%s3 + $0x14] sm:$0xf]
  %v214 = vld [vmem:[%s3 + $0x18] sm:$0xf]
  %v215 = vld [vmem:[%s3 + $0x1c] sm:$0xf]
  %v216 = vld [vmem:[%s3 + $0x20] sm:$0xf]
  %v217 = vld [vmem:[%s3 + $0x24] sm:$0xf]
  %v218 = vld [vmem:[%s3 + $0x28] sm:$0xf]
  %v219 = vld [vmem:[%s3 + $0x2c] sm:$0xf]
  %v220 = vld [vmem:[%s3 + $0x30] sm:$0xf]
  %v221 = vld [vmem:[%s3 + $0x34] sm:$0xf]
  %v222 = vld [vmem:[%s3 + $0x38] sm:$0xf]
  %v223 = vld [vmem:[%s3 + $0x3c] sm:$0xf]
  %v224 = vld [vmem:[%s4] sm:$0x1]
  %v226 = vperm.slane %v224, 0
  %v244 = vunpack.c.l.b16 %v208
  %v245 = vunpack.c.l.b16 %v209
  %v246 = vunpack.c.l.b16 %v210
  %v247 = vunpack.c.l.b16 %v211
  %v248 = vunpack.c.l.b16 %v212
  %v249 = vunpack.c.l.b16 %v213
  %v250 = vunpack.c.l.b16 %v214
  %v251 = vunpack.c.l.b16 %v215
  %v252 = vunpack.c.l.b16 %v216
  %v253 = vunpack.c.l.b16 %v217
  %v254 = vunpack.c.l.b16 %v218
  %v255 = vunpack.c.l.b16 %v219
  %v256 = vunpack.c.l.b16 %v220
  %v257 = vunpack.c.l.b16 %v221
  %v258 = vunpack.c.l.b16 %v222
  %v259 = vunpack.c.l.b16 %v223
  %v260 = vpack.c.b16 %v245, %v244
  %v261 = vpack.c.b16 %v247, %v246
  %v262 = vpack.c.b16 %v249, %v248
  %v263 = vpack.c.b16 %v251, %v250
  %v264 = vpack.c.b16 %v253, %v252
  %v265 = vpack.c.b16 %v255, %v254
  %v266 = vpack.c.b16 %v257, %v256
  %v267 = vpack.c.b16 %v259, %v258
  %276 = vmatpush.bf16.msra.mxu0 %v267
  %277 = vmatpush.bf16.msra.mxu0 %v266
  %278 = vmatpush.bf16.msra.mxu0 %v265
  %279 = vmatpush.bf16.msra.mxu0 %v264
  %280 = vmatpush.bf16.msra.mxu0 %v263
  %281 = vmatpush.bf16.msra.mxu0 %v262
  %282 = vmatpush.bf16.msra.mxu0 %v261
  %283 = vmatpush.bf16.msra.mxu0 %v260
  %284 = vmatmul.bf16.gmra.mxu0 %v207
  %v285 = vpop.f32.mrf.mxu0
  %v286 = vadd.f32 %v226, %v285
  %v287 = vpop.f32.mrf.mxu0
  %v288 = vadd.f32 %v226, %v287
  %289 = vdwg.mxu0
  %v290 = vmax.f32 %v286, 0.0
  %v291 = vmax.f32 %v288, 0.0
  %v292 = vpack.c.bf16 %v291, %v290
  %v293 = vld [vmem:[%s5] sm:$0xf]
  %v294 = vld [vmem:[%s5 + $0x4] sm:$0xf]
  %v295 = vld [vmem:[%s5 + $0x8] sm:$0xf]
  %v296 = vld [vmem:[%s5 + $0xc] sm:$0xf]
  %v297 = vld [vmem:[%s5 + $0x10] sm:$0xf]
  %v298 = vld [vmem:[%s5 + $0x14] sm:$0xf]
  %v299 = vld [vmem:[%s5 + $0x18] sm:$0xf]
  %v300 = vld [vmem:[%s5 + $0x1c] sm:$0xf]
  %v301 = vld [vmem:[%s6] sm:$0x1]
  %v303 = vperm.slane %v301, 0
  %v313 = vunpack.c.l.b16 %v293
  %v314 = vunpack.c.l.b16 %v294
  %v315 = vunpack.c.l.b16 %v295
  %v316 = vunpack.c.l.b16 %v296
  %v317 = vunpack.c.l.b16 %v297
  %v318 = vunpack.c.l.b16 %v298
  %v319 = vunpack.c.l.b16 %v299
  %v320 = vunpack.c.l.b16 %v300
  %v321 = vpack.c.b16 %v314, %v313
  %v322 = vpack.c.b16 %v316, %v315
  %v323 = vpack.c.b16 %v318, %v317
  %v324 = vpack.c.b16 %v320, %v319
  %vm329 = vcmask 523264
  %v331 = vsel %vm329, %v292, 0
  %333 = vmatpush.bf16.msra.mxu0 0
  %334 = vmatpush.bf16.msra.mxu0 0
  %335 = vmatpush.bf16.msra.mxu0 0
  %336 = vmatpush.bf16.msra.mxu0 0
  %337 = vmatpush.bf16.msra.mxu0 %v324
  %338 = vmatpush.bf16.msra.mxu0 %v323
  %339 = vmatpush.bf16.msra.mxu0 %v322
  %340 = vmatpush.bf16.msra.mxu0 %v321
  %341 = vmatmul.bf16.gmra.mxu0 %v331
  %v342 = vpop.f32.mrf.mxu0
  %v343 = vadd.f32 %v303, %v342
  %v344 = vpop.f32.mrf.mxu0
  %v345 = vadd.f32 %v303, %v344
  %346 = vdwg.mxu0
  %v347 = vmax.f32 %v343, 0.0
  %v348 = vmax.f32 %v345, 0.0
  %v349 = vpack.c.bf16 %v348, %v347
  %v350 = vld [vmem:[%s7] sm:$0xf]
  %v351 = vld [vmem:[%s7 + $0x4] sm:$0xf]
  %v352 = vld [vmem:[%s7 + $0x8] sm:$0xf]
  %v353 = vld [vmem:[%s7 + $0xc] sm:$0xf]
  %v354 = vld [vmem:[%s8] sm:$0x1]
  %v356 = vperm.slane %v354, 0
  %v362 = vunpack.c.l.b16 %v350
  %v363 = vunpack.c.l.b16 %v351
  %v364 = vunpack.c.l.b16 %v352
  %v365 = vunpack.c.l.b16 %v353
  %v366 = vpack.c.b16 %v363, %v362
  %v367 = vpack.c.b16 %v365, %v364
  %vm370 = vcmask 261120
  %v372 = vsel %vm370, %v349, 0
  %374 = vmatpush.bf16.msra.mxu0 0
  %375 = vmatpush.bf16.msra.mxu0 0
  %376 = vmatpush.bf16.msra.mxu0 0
  %377 = vmatpush.bf16.msra.mxu0 0
  %378 = vmatpush.bf16.msra.mxu0 0
  %379 = vmatpush.bf16.msra.mxu0 0
  %380 = vmatpush.bf16.msra.mxu0 %v367
  %381 = vmatpush.bf16.msra.mxu0 %v366
  %382 = vmatmul.bf16.gmra.mxu0 %v372
  %v383 = vpop.f32.mrf.mxu0
  %v384 = vadd.f32 %v356, %v383
  %v385 = vpop.f32.mrf.mxu0
  %v386 = vadd.f32 %v356, %v385
  %387 = vdwg.mxu0
  %388 = vst.msk [vmem:[%s9] sm:$0xff] %vm329, %v384
  %389 = vst.msk [vmem:[%s9 + $0x8] sm:$0xff] %vm329, %v386
  // Predicated region
  $region38: #{mask_encoder_forward.1} parent=0 // pred_check
    _
  $region39: #{mask_encoder_forward.1} parent=0 // pred_check_branch
    %391 = sbr.rel (0) target = $region41
  $region40: #{mask_encoder_forward.1} parent=0 // pred_region
    _
  $region41: #{mask_encoder_forward.1} parent=0 // pred_fallthru
    _
  // Predicated region
  $region42: #{mask_encoder_forward.1} parent=0 // pred_check
    _
  $region43: #{mask_encoder_forward.1} parent=0 // pred_check_branch
    %393 = sbr.rel (0) target = $region45
  $region44: #{mask_encoder_forward.1} parent=0 // pred_region
    _
  $region45: #{mask_encoder_forward.1} parent=0 // pred_fallthru
    _

</llo_original>
